<compile_context>
chip_gen: v7x
topology: tpu7x:2x2x1
jax: 0.10.0
libtpu: 0.0.40
codegen_flags: <defaults>
</compile_context>

<pallas_src>
import jax
import jax.numpy as jnp
from jax.experimental import pallas as pl
from jax.experimental.pallas import tpu as pltpu


def _round_up(n, m):
    return ((n + m - 1) // m) * m


def _ffn_kernel(x_ref, gamma_ref, beta_ref, w1_ref, b1_ref, w2_ref, b2_ref, o_ref):
    # x_ref: (TILE_ROWS, D) tile of flattened (B*T, D) activations
    x = x_ref[...].astype(jnp.float32)

    # --- LayerNorm (eps = 1e-5, PyTorch default), f32 ---
    mean = jnp.mean(x, axis=-1, keepdims=True)
    cent = x - mean
    var = jnp.mean(cent * cent, axis=-1, keepdims=True)
    xn = cent * jax.lax.rsqrt(var + 1e-5)
    xn = xn * gamma_ref[...].astype(jnp.float32) + beta_ref[...].astype(jnp.float32)

    # --- Linear expand: (rows, D) @ (D, 4D) + b1 ; bf16 operands, f32 accumulation ---
    h = jnp.dot(xn.astype(w1_ref.dtype), w1_ref[...],
                preferred_element_type=jnp.float32)
    h = h + b1_ref[...].astype(jnp.float32)

    # --- Swish: h * sigmoid(h) (EUP) ---
    h = h * jax.nn.sigmoid(h)

    # (dropout_pre: identity in eval)

    # --- Linear project: (rows, 4D) @ (4D, D) + b2 ; bf16 operands, f32 accumulation ---
    y = jnp.dot(h.astype(w2_ref.dtype), w2_ref[...],
                preferred_element_type=jnp.float32)
    y = y + b2_ref[...].astype(jnp.float32)

    # (dropout_post: identity in eval)

    # --- residual add ---
    o_ref[...] = (y + x).astype(o_ref.dtype)


def conformer_feed_forward(x, gamma, beta, w1_t, b1, w2_t, b2, *,
                           tile_rows=256, matmul_dtype=jnp.bfloat16):
    """x: (B, T, D). w1_t: (D, 4D). w2_t: (4D, D). Returns (B, T, D)."""
    B, T, D = x.shape
    H = w1_t.shape[1]
    rows = B * T

    # Clamp / round the row tile; pad rows so arbitrary B*T is supported.
    tile_rows = max(8, min(int(tile_rows), _round_up(rows, 8)))
    tile_rows = _round_up(tile_rows, 8)
    padded = _round_up(rows, tile_rows)
    grid = padded // tile_rows

    x2 = x.reshape(rows, D)
    if padded != rows:
        x2 = jnp.pad(x2, ((0, padded - rows), (0, 0)))

    gamma2 = gamma.reshape(1, D).astype(jnp.float32)
    beta2 = beta.reshape(1, D).astype(jnp.float32)
    b1_2 = b1.reshape(1, H).astype(jnp.float32)
    b2_2 = b2.reshape(1, D).astype(jnp.float32)
    w1c = w1_t.astype(matmul_dtype)
    w2c = w2_t.astype(matmul_dtype)

    itemsize_x = jnp.dtype(x.dtype).itemsize
    itemsize_w = jnp.dtype(matmul_dtype).itemsize
    cost = pl.CostEstimate(
        flops=int(4 * padded * D * H),                       # two matmuls
        transcendentals=int(padded * H),                     # sigmoid
        bytes_accessed=int(2 * padded * D * itemsize_x       # x in + out
                           + 2 * D * H * itemsize_w          # W1, W2
                           + (3 * D + H) * 4),               # gamma, beta, b1, b2
    )

    def _const_spec(shape, single_buffer):
        # Invariant block (index_map always (0, 0)); single-buffer to halve VMEM residency.
        if single_buffer:
            return pl.BlockSpec(shape, lambda i: (0, 0),
                                pipeline_mode=pl.Buffered(1))
        return pl.BlockSpec(shape, lambda i: (0, 0))

    def _build(single_buffer):
        return pl.pallas_call(
            _ffn_kernel,
            out_shape=jax.ShapeDtypeStruct((padded, D), x.dtype),
            grid_spec=pltpu.PrefetchScalarGridSpec(
                num_scalar_prefetch=0,
                grid=(grid,),
                in_specs=[
                    pl.BlockSpec((tile_rows, D), lambda i: (i, 0)),   # x tile
                    _const_spec((1, D), single_buffer),               # gamma
                    _const_spec((1, D), single_buffer),               # beta
                    _const_spec((D, H), single_buffer),               # W1^T (bf16)
                    _const_spec((1, H), single_buffer),               # b1
                    _const_spec((H, D), single_buffer),               # W2^T (bf16)
                    _const_spec((1, D), single_buffer),               # b2
                ],
                out_specs=pl.BlockSpec((tile_rows, D), lambda i: (i, 0)),
            ),
            compiler_params=pltpu.CompilerParams(
                dimension_semantics=("parallel",),
                vmem_limit_bytes=100 * 1024 * 1024,
            ),
            cost_estimate=cost,
        )

    args = (x2, gamma2, beta2, w1c, b1_2, w2c, b2_2)
    try:
        out = _build(True)(*args)
    except Exception:
        # Fall back to default (double-buffered) specs if single-buffering is unsupported.
        out = _build(False)(*args)

    if padded != rows:
        out = out[:rows]
    return out.reshape(B, T, D)


def reference_ffn(x, gamma, beta, w1_t, b1, w2_t, b2, matmul_dtype=jnp.bfloat16):
    """Pure-JAX reference mimicking the kernel's bf16 matmul / f32 accumulation."""
    xf = x.astype(jnp.float32)
    mean = jnp.mean(xf, axis=-1, keepdims=True)
    var = jnp.mean((xf - mean) ** 2, axis=-1, keepdims=True)
    xn = (xf - mean) * jax.lax.rsqrt(var + 1e-5) * gamma + beta
    h = jnp.dot(xn.astype(matmul_dtype), w1_t.astype(matmul_dtype),
                preferred_element_type=jnp.float32) + b1
    h = h * jax.nn.sigmoid(h)
    y = jnp.dot(h.astype(matmul_dtype), w2_t.astype(matmul_dtype),
                preferred_element_type=jnp.float32) + b2
    return (y + xf).astype(x.dtype)


if __name__ == "__main__":
    D = 32
    H = 4 * D

    key = jax.random.PRNGKey(0)
    kx, kx2, kg, kb, kw1, kb1, kw2, kb2 = jax.random.split(key, 8)

    # Parameters (deterministic init). PyTorch Linear weight is (out, in); we store
    # the transposed (in, out) form used by the kernel directly.
    gamma = jnp.ones((D,), dtype=jnp.float32) + 0.01 * jax.random.normal(kg, (D,), dtype=jnp.float32)
    beta = 0.01 * jax.random.normal(kb, (D,), dtype=jnp.float32)
    w1_t = jax.random.normal(kw1, (D, H), dtype=jnp.float32) * (1.0 / jnp.sqrt(D))
    b1 = 0.01 * jax.random.normal(kb1, (H,), dtype=jnp.float32)
    w2_t = jax.random.normal(kw2, (H, D), dtype=jnp.float32) * (1.0 / jnp.sqrt(H))
    b2 = 0.01 * jax.random.normal(kb2, (D,), dtype=jnp.float32)

    # Case 1: small, evenly-tiled shape (B=2, T=8, D=32).
    x = jax.random.normal(kx, (2, 8, D), dtype=jnp.float32)
    out = conformer_feed_forward(x, gamma, beta, w1_t, b1, w2_t, b2, tile_rows=256)
    out = jax.block_until_ready(out)
    ref = reference_ffn(x, gamma, beta, w1_t, b1, w2_t, b2)
    assert out.shape == x.shape
    assert jnp.allclose(out, ref, atol=1e-2, rtol=1e-2), "mismatch vs reference (case 1)"

    # Case 2: rows not a multiple of the tile -> exercises the padding path.
    xb = jax.random.normal(kx2, (2, 13, D), dtype=jnp.float32)
    outb = conformer_feed_forward(xb, gamma, beta, w1_t, b1, w2_t, b2, tile_rows=256)
    outb = jax.block_until_ready(outb)
    refb = reference_ffn(xb, gamma, beta, w1_t, b1, w2_t, b2)
    assert outb.shape == xb.shape
    assert jnp.allclose(outb, refb, atol=1e-2, rtol=1e-2), "mismatch vs reference (case 2)"

    print("KERNEL_OK")
</pallas_src>

<mosaic_0001>
module attributes {stable_mosaic.version = 11 : i64} {
  func.func @_ffn_kernel(%arg0: i32, %arg1: memref<16x32xf32, #tpu.memory_space<vmem>>, %arg2: memref<1x32xf32, #tpu.memory_space<vmem>>, %arg3: memref<1x32xf32, #tpu.memory_space<vmem>>, %arg4: memref<32x128xbf16, #tpu.memory_space<vmem>>, %arg5: memref<1x128xf32, #tpu.memory_space<vmem>>, %arg6: memref<128x32xbf16, #tpu.memory_space<vmem>>, %arg7: memref<1x32xf32, #tpu.memory_space<vmem>>, %arg8: memref<16x32xf32, #tpu.memory_space<vmem>>) attributes {dimension_semantics = [#tpu.dimension_semantics<parallel>], iteration_bounds = array<i64: 1>, scalar_prefetch = 0 : i64, scratch_operands = 0 : i64, tpu.core_type = #tpu.core_type<tc>, window_params = [{transform_indices = @transform_0, window_bounds = array<i64: 16, 32>}, {pipeline_mode = #tpu.pipeline_mode<synchronous>, transform_indices = @transform_1, window_bounds = array<i64: 1, 32>}, {pipeline_mode = #tpu.pipeline_mode<synchronous>, transform_indices = @transform_2, window_bounds = array<i64: 1, 32>}, {pipeline_mode = #tpu.pipeline_mode<synchronous>, transform_indices = @transform_3, window_bounds = array<i64: 32, 128>}, {pipeline_mode = #tpu.pipeline_mode<synchronous>, transform_indices = @transform_4, window_bounds = array<i64: 1, 128>}, {pipeline_mode = #tpu.pipeline_mode<synchronous>, transform_indices = @transform_5, window_bounds = array<i64: 128, 32>}, {pipeline_mode = #tpu.pipeline_mode<synchronous>, transform_indices = @transform_6, window_bounds = array<i64: 1, 32>}, {transform_indices = @transform_7, window_bounds = array<i64: 16, 32>}]} {
    %c0 = arith.constant 0 : index
    %c0_0 = arith.constant 0 : index
    %0 = vector.load %arg1[%c0, %c0_0] : memref<16x32xf32, #tpu.memory_space<vmem>>, vector<16x32xf32>
    %cst = arith.constant dense<0.000000e+00> : vector<16xf32>
    %1 = vector.multi_reduction <add>, %0, %cst [1] : vector<16x32xf32> to vector<16xf32>
    %2 = vector.shape_cast %1 : vector<16xf32> to vector<16x1xf32>
    %cst_1 = arith.constant 3.200000e+01 : f32
    %3 = vector.broadcast %cst_1 : f32 to vector<16x1xf32>
    %4 = arith.divf %2, %3 : vector<16x1xf32>
    %5 = vector.broadcast %4 : vector<16x1xf32> to vector<16x32xf32>
    %6 = arith.subf %0, %5 : vector<16x32xf32>
    %7 = arith.mulf %6, %6 : vector<16x32xf32>
    %cst_2 = arith.constant dense<0.000000e+00> : vector<16xf32>
    %8 = vector.multi_reduction <add>, %7, %cst_2 [1] : vector<16x32xf32> to vector<16xf32>
    %9 = vector.shape_cast %8 : vector<16xf32> to vector<16x1xf32>
    %cst_3 = arith.constant 3.200000e+01 : f32
    %10 = vector.broadcast %cst_3 : f32 to vector<16x1xf32>
    %11 = arith.divf %9, %10 : vector<16x1xf32>
    %cst_4 = arith.constant 9.99999974E-6 : f32
    %12 = vector.broadcast %cst_4 : f32 to vector<16x1xf32>
    %13 = arith.addf %11, %12 : vector<16x1xf32>
    %14 = math.rsqrt %13 : vector<16x1xf32>
    %15 = vector.broadcast %14 : vector<16x1xf32> to vector<16x32xf32>
    %16 = arith.mulf %6, %15 : vector<16x32xf32>
    %c0_5 = arith.constant 0 : index
    %c0_6 = arith.constant 0 : index
    %17 = vector.load %arg2[%c0_5, %c0_6] : memref<1x32xf32, #tpu.memory_space<vmem>>, vector<1x32xf32>
    %18 = vector.broadcast %17 : vector<1x32xf32> to vector<16x32xf32>
    %19 = arith.mulf %16, %18 : vector<16x32xf32>
    %c0_7 = arith.constant 0 : index
    %c0_8 = arith.constant 0 : index
    %20 = vector.load %arg3[%c0_7, %c0_8] : memref<1x32xf32, #tpu.memory_space<vmem>>, vector<1x32xf32>
    %21 = vector.broadcast %20 : vector<1x32xf32> to vector<16x32xf32>
    %22 = arith.addf %19, %21 : vector<16x32xf32>
    %23 = arith.truncf %22 : vector<16x32xf32> to vector<16x32xbf16>
    %c0_9 = arith.constant 0 : index
    %c0_10 = arith.constant 0 : index
    %24 = vector.load %arg4[%c0_9, %c0_10] : memref<32x128xbf16, #tpu.memory_space<vmem>>, vector<32x128xbf16>
    %cst_11 = arith.constant dense<0.000000e+00> : vector<16x128xf32>
    %25 = tpu.matmul %23, %24, %cst_11 {dimension_numbers = #tpu.dot_dimension_numbers<[1], [0], [0], [1], [0, 0, 1, 1], [], []>} : vector<16x32xbf16>, vector<32x128xbf16>, vector<16x128xf32> -> vector<16x128xf32>
    %c0_12 = arith.constant 0 : index
    %c0_13 = arith.constant 0 : index
    %26 = vector.load %arg5[%c0_12, %c0_13] : memref<1x128xf32, #tpu.memory_space<vmem>>, vector<1x128xf32>
    %27 = vector.broadcast %26 : vector<1x128xf32> to vector<16x128xf32>
    %28 = arith.addf %25, %27 : vector<16x128xf32>
    %29 = arith.negf %28 : vector<16x128xf32>
    %30 = math.exp %29 : vector<16x128xf32>
    %cst_14 = arith.constant 1.000000e+00 : f32
    %31 = vector.broadcast %cst_14 : f32 to vector<16x128xf32>
    %32 = arith.addf %31, %30 : vector<16x128xf32>
    %33 = arith.divf %31, %32 : vector<16x128xf32>
    %34 = arith.mulf %28, %33 : vector<16x128xf32>
    %35 = arith.truncf %34 : vector<16x128xf32> to vector<16x128xbf16>
    %c0_15 = arith.constant 0 : index
    %c0_16 = arith.constant 0 : index
    %36 = vector.load %arg6[%c0_15, %c0_16] : memref<128x32xbf16, #tpu.memory_space<vmem>>, vector<128x32xbf16>
    %cst_17 = arith.constant dense<0.000000e+00> : vector<16x32xf32>
    %37 = tpu.matmul %35, %36, %cst_17 {dimension_numbers = #tpu.dot_dimension_numbers<[1], [0], [0], [1], [0, 0, 1, 1], [], []>} : vector<16x128xbf16>, vector<128x32xbf16>, vector<16x32xf32> -> vector<16x32xf32>
    %c0_18 = arith.constant 0 : index
    %c0_19 = arith.constant 0 : index
    %38 = vector.load %arg7[%c0_18, %c0_19] : memref<1x32xf32, #tpu.memory_space<vmem>>, vector<1x32xf32>
    %39 = vector.broadcast %38 : vector<1x32xf32> to vector<16x32xf32>
    %40 = arith.addf %37, %39 : vector<16x32xf32>
    %41 = arith.addf %40, %0 : vector<16x32xf32>
    %c0_20 = arith.constant 0 : index
    %c0_21 = arith.constant 0 : index
    %42 = vector.load %arg8[%c0_20, %c0_21] : memref<16x32xf32, #tpu.memory_space<vmem>>, vector<16x32xf32>
    tpu.vector_store %arg8[%c0_20, %c0_21], %41 {strides = array<i32>} : memref<16x32xf32, #tpu.memory_space<vmem>>, vector<16x32xf32>,
    return
  }
  func.func @transform_0(%arg0: i32) -> (i32, i32) {
    %c0_i32 = arith.constant 0 : i32
    %c0_i32_0 = arith.constant 0 : i32
    return %arg0, %c0_i32 : i32, i32
  }
  func.func @transform_1(%arg0: i32) -> (i32, i32) {
    %c0_i32 = arith.constant 0 : i32
    %c0_i32_0 = arith.constant 0 : i32
    %c0_i32_1 = arith.constant 0 : i32
    return %c0_i32, %c0_i32_0 : i32, i32
  }
  func.func @transform_2(%arg0: i32) -> (i32, i32) {
    %c0_i32 = arith.constant 0 : i32
    %c0_i32_0 = arith.constant 0 : i32
    %c0_i32_1 = arith.constant 0 : i32
    return %c0_i32, %c0_i32_0 : i32, i32
  }
  func.func @transform_3(%arg0: i32) -> (i32, i32) {
    %c0_i32 = arith.constant 0 : i32
    %c0_i32_0 = arith.constant 0 : i32
    %c0_i32_1 = arith.constant 0 : i32
    return %c0_i32, %c0_i32_0 : i32, i32
  }
  func.func @transform_4(%arg0: i32) -> (i32, i32) {
    %c0_i32 = arith.constant 0 : i32
    %c0_i32_0 = arith.constant 0 : i32
    %c0_i32_1 = arith.constant 0 : i32
    return %c0_i32, %c0_i32_0 : i32, i32
  }
  func.func @transform_5(%arg0: i32) -> (i32, i32) {
    %c0_i32 = arith.constant 0 : i32
    %c0_i32_0 = arith.constant 0 : i32
    %c0_i32_1 = arith.constant 0 : i32
    return %c0_i32, %c0_i32_0 : i32, i32
  }
  func.func @transform_6(%arg0: i32) -> (i32, i32) {
    %c0_i32 = arith.constant 0 : i32
    %c0_i32_0 = arith.constant 0 : i32
    %c0_i32_1 = arith.constant 0 : i32
    return %c0_i32, %c0_i32_0 : i32, i32
  }
  func.func @transform_7(%arg0: i32) -> (i32, i32) {
    %c0_i32 = arith.constant 0 : i32
    %c0_i32_0 = arith.constant 0 : i32
    return %arg0, %c0_i32 : i32, i32
  }
}

module attributes {stable_mosaic.version = 11 : i64} {
  func.func @_ffn_kernel(%arg0: i32, %arg1: memref<16x32xf32, #tpu.memory_space<vmem>>, %arg2: memref<1x32xf32, #tpu.memory_space<vmem>>, %arg3: memref<1x32xf32, #tpu.memory_space<vmem>>, %arg4: memref<32x128xbf16, #tpu.memory_space<vmem>>, %arg5: memref<1x128xf32, #tpu.memory_space<vmem>>, %arg6: memref<128x32xbf16, #tpu.memory_space<vmem>>, %arg7: memref<1x32xf32, #tpu.memory_space<vmem>>, %arg8: memref<16x32xf32, #tpu.memory_space<vmem>>) attributes {dimension_semantics = [#tpu.dimension_semantics<parallel>], iteration_bounds = array<i64: 1>, scalar_prefetch = 0 : i64, scratch_operands = 0 : i64, tpu.core_type = #tpu.core_type<tc>, window_params = [{transform_indices = @transform_0, window_bounds = array<i64: 16, 32>}, {pipeline_mode = #tpu.pipeline_mode<synchronous>, transform_indices = @transform_1, window_bounds = array<i64: 1, 32>}, {pipeline_mode = #tpu.pipeline_mode<synchronous>, transform_indices = @transform_2, window_bounds = array<i64: 1, 32>}, {pipeline_mode = #tpu.pipeline_mode<synchronous>, transform_indices = @transform_3, window_bounds = array<i64: 32, 128>}, {pipeline_mode = #tpu.pipeline_mode<synchronous>, transform_indices = @transform_4, window_bounds = array<i64: 1, 128>}, {pipeline_mode = #tpu.pipeline_mode<synchronous>, transform_indices = @transform_5, window_bounds = array<i64: 128, 32>}, {pipeline_mode = #tpu.pipeline_mode<synchronous>, transform_indices = @transform_6, window_bounds = array<i64: 1, 32>}, {transform_indices = @transform_7, window_bounds = array<i64: 16, 32>}]} {
    %c0 = arith.constant 0 : index
    %c0_0 = arith.constant 0 : index
    %0 = vector.load %arg1[%c0, %c0_0] : memref<16x32xf32, #tpu.memory_space<vmem>>, vector<16x32xf32>
    %cst = arith.constant dense<0.000000e+00> : vector<16xf32>
    %1 = vector.multi_reduction <add>, %0, %cst [1] : vector<16x32xf32> to vector<16xf32>
    %2 = vector.shape_cast %1 : vector<16xf32> to vector<16x1xf32>
    %cst_1 = arith.constant 3.200000e+01 : f32
    %3 = vector.broadcast %cst_1 : f32 to vector<16x1xf32>
    %4 = arith.divf %2, %3 : vector<16x1xf32>
    %5 = vector.broadcast %4 : vector<16x1xf32> to vector<16x32xf32>
    %6 = arith.subf %0, %5 : vector<16x32xf32>
    %7 = arith.mulf %6, %6 : vector<16x32xf32>
    %cst_2 = arith.constant dense<0.000000e+00> : vector<16xf32>
    %8 = vector.multi_reduction <add>, %7, %cst_2 [1] : vector<16x32xf32> to vector<16xf32>
    %9 = vector.shape_cast %8 : vector<16xf32> to vector<16x1xf32>
    %cst_3 = arith.constant 3.200000e+01 : f32
    %10 = vector.broadcast %cst_3 : f32 to vector<16x1xf32>
    %11 = arith.divf %9, %10 : vector<16x1xf32>
    %cst_4 = arith.constant 9.99999974E-6 : f32
    %12 = vector.broadcast %cst_4 : f32 to vector<16x1xf32>
    %13 = arith.addf %11, %12 : vector<16x1xf32>
    %14 = math.rsqrt %13 : vector<16x1xf32>
    %15 = vector.broadcast %14 : vector<16x1xf32> to vector<16x32xf32>
    %16 = arith.mulf %6, %15 : vector<16x32xf32>
    %c0_5 = arith.constant 0 : index
    %c0_6 = arith.constant 0 : index
    %17 = vector.load %arg2[%c0_5, %c0_6] : memref<1x32xf32, #tpu.memory_space<vmem>>, vector<1x32xf32>
    %18 = vector.broadcast %17 : vector<1x32xf32> to vector<16x32xf32>
    %19 = arith.mulf %16, %18 : vector<16x32xf32>
    %c0_7 = arith.constant 0 : index
    %c0_8 = arith.constant 0 : index
    %20 = vector.load %arg3[%c0_7, %c0_8] : memref<1x32xf32, #tpu.memory_space<vmem>>, vector<1x32xf32>
    %21 = vector.broadcast %20 : vector<1x32xf32> to vector<16x32xf32>
    %22 = arith.addf %19, %21 : vector<16x32xf32>
    %23 = arith.truncf %22 : vector<16x32xf32> to vector<16x32xbf16>
    %c0_9 = arith.constant 0 : index
    %c0_10 = arith.constant 0 : index
    %24 = vector.load %arg4[%c0_9, %c0_10] : memref<32x128xbf16, #tpu.memory_space<vmem>>, vector<32x128xbf16>
    %cst_11 = arith.constant dense<0.000000e+00> : vector<16x128xf32>
    %25 = tpu.matmul %23, %24, %cst_11 {dimension_numbers = #tpu.dot_dimension_numbers<[1], [0], [0], [1], [0, 0, 1, 1], [], []>} : vector<16x32xbf16>, vector<32x128xbf16>, vector<16x128xf32> -> vector<16x128xf32>
    %c0_12 = arith.constant 0 : index
    %c0_13 = arith.constant 0 : index
    %26 = vector.load %arg5[%c0_12, %c0_13] : memref<1x128xf32, #tpu.memory_space<vmem>>, vector<1x128xf32>
    %27 = vector.broadcast %26 : vector<1x128xf32> to vector<16x128xf32>
    %28 = arith.addf %25, %27 : vector<16x128xf32>
    %29 = arith.negf %28 : vector<16x128xf32>
    %30 = math.exp %29 : vector<16x128xf32>
    %cst_14 = arith.constant 1.000000e+00 : f32
    %31 = vector.broadcast %cst_14 : f32 to vector<16x128xf32>
    %32 = arith.addf %31, %30 : vector<16x128xf32>
    %33 = arith.divf %31, %32 : vector<16x128xf32>
    %34 = arith.mulf %28, %33 : vector<16x128xf32>
    %35 = arith.truncf %34 : vector<16x128xf32> to vector<16x128xbf16>
    %c0_15 = arith.constant 0 : index
    %c0_16 = arith.constant 0 : index
    %36 = vector.load %arg6[%c0_15, %c0_16] : memref<128x32xbf16, #tpu.memory_space<vmem>>, vector<128x32xbf16>
    %cst_17 = arith.constant dense<0.000000e+00> : vector<16x32xf32>
    %37 = tpu.matmul %35, %36, %cst_17 {dimension_numbers = #tpu.dot_dimension_numbers<[1], [0], [0], [1], [0, 0, 1, 1], [], []>} : vector<16x128xbf16>, vector<128x32xbf16>, vector<16x32xf32> -> vector<16x32xf32>
    %c0_18 = arith.constant 0 : index
    %c0_19 = arith.constant 0 : index
    %38 = vector.load %arg7[%c0_18, %c0_19] : memref<1x32xf32, #tpu.memory_space<vmem>>, vector<1x32xf32>
    %39 = vector.broadcast %38 : vector<1x32xf32> to vector<16x32xf32>
    %40 = arith.addf %37, %39 : vector<16x32xf32>
    %41 = arith.addf %40, %0 : vector<16x32xf32>
    %c0_20 = arith.constant 0 : index
    %c0_21 = arith.constant 0 : index
    %42 = vector.load %arg8[%c0_20, %c0_21] : memref<16x32xf32, #tpu.memory_space<vmem>>, vector<16x32xf32>
    tpu.vector_store %arg8[%c0_20, %c0_21], %41 {strides = array<i32>} : memref<16x32xf32, #tpu.memory_space<vmem>>, vector<16x32xf32>,
    return
  }
  func.func @transform_0(%arg0: i32) -> (i32, i32) {
    %c0_i32 = arith.constant 0 : i32
    %c0_i32_0 = arith.constant 0 : i32
    return %arg0, %c0_i32 : i32, i32
  }
  func.func @transform_1(%arg0: i32) -> (i32, i32) {
    %c0_i32 = arith.constant 0 : i32
    %c0_i32_0 = arith.constant 0 : i32
    %c0_i32_1 = arith.constant 0 : i32
    return %c0_i32, %c0_i32_0 : i32, i32
  }
  func.func @transform_2(%arg0: i32) -> (i32, i32) {
    %c0_i32 = arith.constant 0 : i32
    %c0_i32_0 = arith.constant 0 : i32
    %c0_i32_1 = arith.constant 0 : i32
    return %c0_i32, %c0_i32_0 : i32, i32
  }
  func.func @transform_3(%arg0: i32) -> (i32, i32) {
    %c0_i32 = arith.constant 0 : i32
    %c0_i32_0 = arith.constant 0 : i32
    %c0_i32_1 = arith.constant 0 : i32
    return %c0_i32, %c0_i32_0 : i32, i32
  }
  func.func @transform_4(%arg0: i32) -> (i32, i32) {
    %c0_i32 = arith.constant 0 : i32
    %c0_i32_0 = arith.constant 0 : i32
    %c0_i32_1 = arith.constant 0 : i32
    return %c0_i32, %c0_i32_0 : i32, i32
  }
  func.func @transform_5(%arg0: i32) -> (i32, i32) {
    %c0_i32 = arith.constant 0 : i32
    %c0_i32_0 = arith.constant 0 : i32
    %c0_i32_1 = arith.constant 0 : i32
    return %c0_i32, %c0_i32_0 : i32, i32
  }
  func.func @transform_6(%arg0: i32) -> (i32, i32) {
    %c0_i32 = arith.constant 0 : i32
    %c0_i32_0 = arith.constant 0 : i32
    %c0_i32_1 = arith.constant 0 : i32
    return %c0_i32, %c0_i32_0 : i32, i32
  }
  func.func @transform_7(%arg0: i32) -> (i32, i32) {
    %c0_i32 = arith.constant 0 : i32
    %c0_i32_0 = arith.constant 0 : i32
    return %arg0, %c0_i32 : i32, i32
  }
}

</mosaic_0001>

<llo_original>
// kernel: tpu_custom_call.1
$region0: #{tpu_custom_call.1}
  #allocation0 [shape = 'u32[]', space=smem, size = 0x4, offset = 0x4, fixed_abs, tag = 'smem constant byte address 0x4 - core index']
  #allocation1 [shape = 'u32[144,128]{1,0:T(1,128)}', space=vmem, size = 0x12000, scoped, tag = 'internal scratch']
  %s0 = inlined_call_operand.hbm [shape: f32[16,32], index: 0, kind: input, shape index: {}]
  %s1 = inlined_call_operand.hbm [shape: f32[1,32], index: 1, kind: input, shape index: {}]
  %s2 = inlined_call_operand.hbm [shape: f32[1,32], index: 2, kind: input, shape index: {}]
  %s3 = inlined_call_operand.hbm [shape: bf16[32,128], index: 3, kind: input, shape index: {}]
  %s4 = inlined_call_operand.hbm [shape: f32[1,128], index: 4, kind: input, shape index: {}]
  %s5 = inlined_call_operand.hbm [shape: bf16[128,32], index: 5, kind: input, shape index: {}]
  %s6 = inlined_call_operand.hbm [shape: f32[1,32], index: 6, kind: input, shape index: {}]
  %s7 = inlined_call_operand.hbm [shape: f32[16,32], index: 7, kind: output, shape index: {}]
  %s8 = sld [smem:[#allocation0]]
  $region66: #{tpu_custom_call.1} parent=0
    _
  %s10 = ssub.s32 1, %s8
  %s11 = scalar_select 0, %s10, %s8
  $region1: #{tpu_custom_call.1} parent=0
    #allocation2 [shape = 'u8[8192]{0}', space=vmem, size = 0x2000, scoped, tag = 'input window, operand 0, single buffered']
    #allocation3 [shape = 's32[1]{0}', space=sflag, size = 0x4, scoped, tag = 'scoped memory for tpu_custom_call.1']
    #allocation4 [shape = 's32[1]{0}', space=sflag, size = 0x4, scoped, tag = 'scoped memory for tpu_custom_call.1']
    #allocation5 [shape = 'u8[512]{0}', space=vmem, size = 0x400, scoped, tag = 'input window, operand 1, single buffered']
    #allocation6 [shape = 's32[1]{0}', space=sflag, size = 0x4, scoped, tag = 'scoped memory for tpu_custom_call.1']
    #allocation7 [shape = 'u8[512]{0}', space=vmem, size = 0x400, scoped, tag = 'input window, operand 2, single buffered']
    #allocation8 [shape = 'u8[8192]{0}', space=vmem, size = 0x2000, scoped, tag = 'input window, operand 3, single buffered']
    #allocation9 [shape = 's32[1]{0}', space=sflag, size = 0x4, scoped, tag = 'scoped memory for tpu_custom_call.1']
    #allocation10 [shape = 'u8[512]{0}', space=vmem, size = 0x400, scoped, tag = 'input window, operand 4, single buffered']
    #allocation11 [shape = 'u8[32768]{0}', space=vmem, size = 0x8000, scoped, tag = 'input window, operand 5, single buffered']
    #allocation12 [shape = 's32[1]{0}', space=sflag, size = 0x4, scoped, tag = 'scoped memory for tpu_custom_call.1']
    #allocation13 [shape = 'u8[512]{0}', space=vmem, size = 0x400, scoped, tag = 'input window, operand 6, single buffered']
    #allocation14 [shape = 'u8[8192]{0}', space=vmem, size = 0x2000, scoped, tag = 'output window, operand 0, single buffered']
    %12 = vsyncpa [#allocation3], 0
    %13 = vsyncpa [#allocation6], 0
    %14 = vsyncpa [#allocation9], 0
    %15 = vsyncpa [#allocation12], 0
    %16 = vsyncpa [#allocation4], 0
    // Predicated region
    $region2: #{tpu_custom_call.1} parent=1 // pred_check
      _
    $region3: #{tpu_custom_call.1} parent=1 // pred_check_branch
      %18 = sbr.rel (0) target = $region5
    $region4: #{tpu_custom_call.1} parent=1 // pred_region
      %s20 = ssub.s32 256, 256
      %21 = vsyncadd [#allocation3], %s20
      %s22 = sshll.u32 [#allocation2], 4
      %s23 = int_to_ptr.vmem [resolvable:$true] %s22
      %28 = dma.hbm_to_vmem [thread:$0]  %s0, 256, %s23, [#allocation3], 128, 128, 8
    $region5: #{tpu_custom_call.1} parent=1 // pred_fallthru
      _
    // Predicated region
    $region6: #{tpu_custom_call.1} parent=1 // pred_check
      _
    $region7: #{tpu_custom_call.1} parent=1 // pred_check_branch
      %30 = sbr.rel (0) target = $region9
    $region8: #{tpu_custom_call.1} parent=1 // pred_region
      %s32 = ssub.s32 16, 16
      %33 = vsyncadd [#allocation6], %s32
      %s35 = sshll.u32 [#allocation5], 4
      %s36 = int_to_ptr.vmem [resolvable:$true] %s35
      %38 = dma.hbm_to_vmem [thread:$0]  %s1, 16, %s36, [#allocation6]
    $region9: #{tpu_custom_call.1} parent=1 // pred_fallthru
      _
    // Predicated region
    $region10: #{tpu_custom_call.1} parent=1 // pred_check
      _
    $region11: #{tpu_custom_call.1} parent=1 // pred_check_branch
      %40 = sbr.rel (0) target = $region13
    $region12: #{tpu_custom_call.1} parent=1 // pred_region
      %s42 = ssub.s32 16, 16
      %43 = vsyncadd [#allocation6], %s42
      %s45 = sshll.u32 [#allocation7], 4
      %s46 = int_to_ptr.vmem [resolvable:$true] %s45
      %48 = dma.hbm_to_vmem [thread:$0]  %s2, 16, %s46, [#allocation6]
    $region13: #{tpu_custom_call.1} parent=1 // pred_fallthru
      _
    // Predicated region
    $region14: #{tpu_custom_call.1} parent=1 // pred_check
      _
    $region15: #{tpu_custom_call.1} parent=1 // pred_check_branch
      %50 = sbr.rel (0) target = $region17
    $region16: #{tpu_custom_call.1} parent=1 // pred_region
      %s52 = ssub.s32 256, 256
      %53 = vsyncadd [#allocation9], %s52
      %s54 = sshll.u32 [#allocation8], 4
      %s55 = int_to_ptr.vmem [resolvable:$true] %s54
      %60 = dma.hbm_to_vmem [thread:$0]  %s3, 256, %s55, [#allocation9], 64, 64, 4
    $region17: #{tpu_custom_call.1} parent=1 // pred_fallthru
      _
    // Predicated region
    $region18: #{tpu_custom_call.1} parent=1 // pred_check
      _
    $region19: #{tpu_custom_call.1} parent=1 // pred_check_branch
      %62 = sbr.rel (0) target = $region21
    $region20: #{tpu_custom_call.1} parent=1 // pred_region
      %s64 = ssub.s32 16, 16
      %65 = vsyncadd [#allocation9], %s64
      %s67 = sshll.u32 [#allocation10], 4
      %s68 = int_to_ptr.vmem [resolvable:$true] %s67
      %70 = dma.hbm_to_vmem [thread:$0]  %s4, 16, %s68, [#allocation9]
    $region21: #{tpu_custom_call.1} parent=1 // pred_fallthru
      _
    // Predicated region
    $region22: #{tpu_custom_call.1} parent=1 // pred_check
      _
    $region23: #{tpu_custom_call.1} parent=1 // pred_check_branch
      %72 = sbr.rel (0) target = $region25
    $region24: #{tpu_custom_call.1} parent=1 // pred_region
      %s74 = ssub.s32 1024, 1024
      %75 = vsyncadd [#allocation12], %s74
      %s76 = sshll.u32 [#allocation11], 4
      %s77 = int_to_ptr.vmem [resolvable:$true] %s76
      %82 = dma.hbm_to_vmem [thread:$0]  %s5, 1024, %s77, [#allocation12], 64, 64, 4
    $region25: #{tpu_custom_call.1} parent=1 // pred_fallthru
      _
    // Predicated region
    $region26: #{tpu_custom_call.1} parent=1 // pred_check
      _
    $region27: #{tpu_custom_call.1} parent=1 // pred_check_branch
      %84 = sbr.rel (0) target = $region29
    $region28: #{tpu_custom_call.1} parent=1 // pred_region
      %s86 = ssub.s32 16, 16
      %87 = vsyncadd [#allocation12], %s86
      %s89 = sshll.u32 [#allocation13], 4
      %s90 = int_to_ptr.vmem [resolvable:$true] %s89
      %92 = dma.hbm_to_vmem [thread:$0]  %s6, 16, %s90, [#allocation12]
    $region29: #{tpu_custom_call.1} parent=1 // pred_fallthru
      _
    // Predicated region
    $region30: #{tpu_custom_call.1} parent=1 // pred_check
      _
    $region31: #{tpu_custom_call.1} parent=1 // pred_check_branch
      %94 = sbr.rel (0) target = $region33
    $region32: #{tpu_custom_call.1} parent=1 // pred_region
      %95 = dma.done [#allocation3], 256
    $region33: #{tpu_custom_call.1} parent=1 // pred_fallthru
      _
    // Predicated region
    $region34: #{tpu_custom_call.1} parent=1 // pred_check
      _
    $region35: #{tpu_custom_call.1} parent=1 // pred_check_branch
      %97 = sbr.rel (0) target = $region37
    $region36: #{tpu_custom_call.1} parent=1 // pred_region
      %98 = dma.done [#allocation6], 16
    $region37: #{tpu_custom_call.1} parent=1 // pred_fallthru
      _
    // Predicated region
    $region38: #{tpu_custom_call.1} parent=1 // pred_check
      _
    $region39: #{tpu_custom_call.1} parent=1 // pred_check_branch
      %100 = sbr.rel (0) target = $region41
    $region40: #{tpu_custom_call.1} parent=1 // pred_region
      %101 = dma.done [#allocation6], 16
    $region41: #{tpu_custom_call.1} parent=1 // pred_fallthru
      _
    // Predicated region
    $region42: #{tpu_custom_call.1} parent=1 // pred_check
      _
    $region43: #{tpu_custom_call.1} parent=1 // pred_check_branch
      %103 = sbr.rel (0) target = $region45
    $region44: #{tpu_custom_call.1} parent=1 // pred_region
      %104 = dma.done [#allocation9], 256
    $region45: #{tpu_custom_call.1} parent=1 // pred_fallthru
      _
    // Predicated region
    $region46: #{tpu_custom_call.1} parent=1 // pred_check
      _
    $region47: #{tpu_custom_call.1} parent=1 // pred_check_branch
      %106 = sbr.rel (0) target = $region49
    $region48: #{tpu_custom_call.1} parent=1 // pred_region
      %107 = dma.done [#allocation9], 16
    $region49: #{tpu_custom_call.1} parent=1 // pred_fallthru
      _
    // Predicated region
    $region50: #{tpu_custom_call.1} parent=1 // pred_check
      _
    $region51: #{tpu_custom_call.1} parent=1 // pred_check_branch
      %109 = sbr.rel (0) target = $region53
    $region52: #{tpu_custom_call.1} parent=1 // pred_region
      %110 = dma.done [#allocation12], 1024
    $region53: #{tpu_custom_call.1} parent=1 // pred_fallthru
      _
    // Predicated region
    $region54: #{tpu_custom_call.1} parent=1 // pred_check
      _
    $region55: #{tpu_custom_call.1} parent=1 // pred_check_branch
      %112 = sbr.rel (0) target = $region57
    $region56: #{tpu_custom_call.1} parent=1 // pred_region
      %113 = dma.done [#allocation12], 16
    $region57: #{tpu_custom_call.1} parent=1 // pred_fallthru
      _
    %v115 = vld [vmem:[#allocation2] sm:$0xff]
    %v116 = vld [vmem:[#allocation2 + $0x8] sm:$0xff]
    %vm117 = vcmask 261120
    %v118 = vsel %vm117, %v115, 0.0
    %119 = vadd.xlane.f32.xlu0 %v118
    %v120 = vpop.xlane.xlu0 %119
    %v121 = vsel %vm117, %v116, 0.0
    %122 = vadd.xlane.f32.xlu0 %v121
    %v123 = vpop.xlane.xlu0 %122
    %v124 = vrcp.pop 32.0
    %v125 = vmul.f32 %v120, %v124
    %v126 = vmul.f32 %v123, %v124
    %v127 = vsub.f32 %v115, %v125
    %v128 = vsub.f32 %v116, %v126
    %v129 = vmul.f32 %v127, %v127
    %v130 = vmul.f32 %v128, %v128
    %v131 = vsel %vm117, %v129, 0.0
    %132 = vadd.xlane.f32.xlu0 %v131
    %v133 = vpop.xlane.xlu0 %132
    %v134 = vsel %vm117, %v130, 0.0
    %135 = vadd.xlane.f32.xlu0 %v134
    %v136 = vpop.xlane.xlu0 %135
    %v137 = vmul.f32 %v133, %v124
    %v138 = vmul.f32 %v136, %v124
    %v139 = vadd.f32 %v137, 1e-05
    %v140 = vadd.f32 %v138, 1e-05
    %v141 = vrsqrt.pop %v139
    %v142 = vrsqrt.pop %v140
    %v143 = vmul.f32 %v127, %v141
    %v144 = vmul.f32 %v128, %v142
    %v145 = vld [vmem:[#allocation5] sm:$0x1]
    %v147 = vlaneseq
    %v148 = vshrl.u32 %v147, 7
    %v149 = vsub.s32 0, %v148
    %v150 = vrot.slane %v145, %v149
    %v152 = vmul.f32 %v143, %v150
    %v153 = vmul.f32 %v144, %v150
    %v154 = vld [vmem:[#allocation7] sm:$0x1]
    %v156 = vlaneseq
    %v157 = vshrl.u32 %v156, 7
    %v158 = vsub.s32 0, %v157
    %v159 = vrot.slane %v154, %v158
    %v161 = vadd.f32 %v152, %v159
    %v162 = vadd.f32 %v153, %v159
    %v163 = vpack.c.bf16 %v162, %v161
    %v164 = vld [vmem:[#allocation8] sm:$0xf]
    %v165 = vld [vmem:[#allocation8 + $0x4] sm:$0xf]
    %v166 = vld [vmem:[#allocation8 + $0x8] sm:$0xf]
    %v167 = vld [vmem:[#allocation8 + $0xc] sm:$0xf]
    %v168 = vld [vmem:[#allocation10] sm:$0x1]
    %v170 = vlaneseq
    %v171 = vshrl.u32 %v170, 7
    %v172 = vsub.s32 0, %v171
    %v173 = vrot.slane %v168, %v172
    %v179 = vunpack.c.l.b16 %v164
    %v180 = vunpack.c.l.b16 %v165
    %v181 = vunpack.c.l.b16 %v166
    %v182 = vunpack.c.l.b16 %v167
    %v183 = vpack.c.b16 %v180, %v179
    %v184 = vpack.c.b16 %v182, %v181
    %v188 = vsel %vm117, %v163, 0
    %190 = vmatprep.subr.bf16.mxu0 0
    %191 = vmatpush1.bf16.msra.mxu0 %v183
    %192 = vmatprep.subr.bf16.mxu0 0
    %193 = vmatpush1.bf16.msra.mxu0 %v184
    %194 = vmatprep.subr.bf16.mxu0 0
    %195 = vmatpush1.bf16.msra.mxu0 0
    %196 = vmatprep.subr.bf16.mxu0 0
    %197 = vmatpush1.bf16.msra.mxu0 0
    %198 = vmatprep.subr.bf16.mxu0 0
    %199 = vmatpush1.bf16.msra.mxu0 0
    %200 = vmatprep.subr.bf16.mxu0 0
    %201 = vmatpush1.bf16.msra.mxu0 0
    %202 = vmatprep.subr.bf16.mxu0 0
    %203 = vmatpush1.bf16.msra.mxu0 0
    %204 = vmatprep.subr.bf16.mxu0 0
    %205 = vmatpush1.bf16.msra.mxu0 0
    %206 = vmatprep.subr.bf16.mxu0 0
    %207 = vmatpush1.bf16.msra.mxu0 0
    %208 = vmatprep.subr.bf16.mxu0 0
    %209 = vmatpush1.bf16.msra.mxu0 0
    %210 = vmatprep.subr.bf16.mxu0 0
    %211 = vmatpush1.bf16.msra.mxu0 0
    %212 = vmatprep.subr.bf16.mxu0 0
    %213 = vmatpush1.bf16.msra.mxu0 0
    %214 = vmatprep.subr.bf16.mxu0 0
    %215 = vmatpush1.bf16.msra.mxu0 0
    %216 = vmatprep.subr.bf16.mxu0 0
    %217 = vmatpush1.bf16.msra.mxu0 0
    %218 = vmatprep.subr.bf16.mxu0 0
    %219 = vmatpush1.bf16.msra.mxu0 0
    %220 = vmatprep.subr.bf16.mxu0 0
    %221 = vmatpush1.bf16.msra.mxu0 0
    %222 = vmatprep.mubr.bf16.mxu0 0
    %223 = vmatmul.mubr.bf16.gmra.mrb[0].mxu0 %v188
    %v224 = vpop.f32.mrb[0].mxu0
    %v225 = vadd.f32 %v173, %v224
    %v226 = vpop.f32.mrb[0].mxu0
    %v227 = vpop.f32.mrb[0].mxu0
    %v228 = vadd.f32 %v173, %v227
    %v229 = vpop.f32.mrb[0].mxu0
    %230 = vdwg.mxu0
    %v231 = vxor.u32 %v225, 2147483648
    %v232 = vxor.u32 %v228, 2147483648
    %v233 = vmul.f32 %v231, 1.442695
    %v234 = vpow.pop %v233
    %v235 = vmul.f32 %v232, 1.442695
    %v236 = vpow.pop %v235
    %v237 = vadd.f32 %v234, 1.0
    %v238 = vadd.f32 %v236, 1.0
    %v239 = vrcp.pop %v237
    %v240 = vmul.f32 1.0, %v239
    %v241 = vrcp.pop %v238
    %v242 = vmul.f32 1.0, %v241
    %v243 = vmul.f32 %v225, %v240
    %v244 = vmul.f32 %v228, %v242
    %v245 = vpack.c.bf16 %v244, %v243
    %v246 = vld [vmem:[#allocation11] sm:$0xf]
    %v247 = vld [vmem:[#allocation11 + $0x4] sm:$0xf]
    %v248 = vld [vmem:[#allocation11 + $0x8] sm:$0xf]
    %v249 = vld [vmem:[#allocation11 + $0xc] sm:$0xf]
    %v250 = vld [vmem:[#allocation11 + $0x10] sm:$0xf]
    %v251 = vld [vmem:[#allocation11 + $0x14] sm:$0xf]
    %v252 = vld [vmem:[#allocation11 + $0x18] sm:$0xf]
    %v253 = vld [vmem:[#allocation11 + $0x1c] sm:$0xf]
    %v254 = vld [vmem:[#allocation11 + $0x20] sm:$0xf]
    %v255 = vld [vmem:[#allocation11 + $0x24] sm:$0xf]
    %v256 = vld [vmem:[#allocation11 + $0x28] sm:$0xf]
    %v257 = vld [vmem:[#allocation11 + $0x2c] sm:$0xf]
    %v258 = vld [vmem:[#allocation11 + $0x30] sm:$0xf]
    %v259 = vld [vmem:[#allocation11 + $0x34] sm:$0xf]
    %v260 = vld [vmem:[#allocation11 + $0x38] sm:$0xf]
    %v261 = vld [vmem:[#allocation11 + $0x3c] sm:$0xf]
    %v262 = vld [vmem:[#allocation13] sm:$0x1]
    %v264 = vlaneseq
    %v265 = vshrl.u32 %v264, 7
    %v266 = vsub.s32 0, %v265
    %v267 = vrot.slane %v262, %v266
    %v285 = vunpack.c.l.b16 %v246
    %v286 = vunpack.c.l.b16 %v247
    %v287 = vunpack.c.l.b16 %v248
    %v288 = vunpack.c.l.b16 %v249
    %v289 = vunpack.c.l.b16 %v250
    %v290 = vunpack.c.l.b16 %v251
    %v291 = vunpack.c.l.b16 %v252
    %v292 = vunpack.c.l.b16 %v253
    %v293 = vunpack.c.l.b16 %v254
    %v294 = vunpack.c.l.b16 %v255
    %v295 = vunpack.c.l.b16 %v256
    %v296 = vunpack.c.l.b16 %v257
    %v297 = vunpack.c.l.b16 %v258
    %v298 = vunpack.c.l.b16 %v259
    %v299 = vunpack.c.l.b16 %v260
    %v300 = vunpack.c.l.b16 %v261
    %v301 = vpack.c.b16 %v286, %v285
    %v302 = vpack.c.b16 %v288, %v287
    %v303 = vpack.c.b16 %v290, %v289
    %v304 = vpack.c.b16 %v292, %v291
    %v305 = vpack.c.b16 %v294, %v293
    %v306 = vpack.c.b16 %v296, %v295
    %v307 = vpack.c.b16 %v298, %v297
    %v308 = vpack.c.b16 %v300, %v299
    %317 = vmatprep.subr.bf16.mxu0 0
    %318 = vmatpush1.bf16.msra.mxu0 %v301
    %319 = vmatprep.subr.bf16.mxu0 0
    %320 = vmatpush1.bf16.msra.mxu0 %v302
    %321 = vmatprep.subr.bf16.mxu0 0
    %322 = vmatpush1.bf16.msra.mxu0 %v303
    %323 = vmatprep.subr.bf16.mxu0 0
    %324 = vmatpush1.bf16.msra.mxu0 %v304
    %325 = vmatprep.subr.bf16.mxu0 0
    %326 = vmatpush1.bf16.msra.mxu0 %v305
    %327 = vmatprep.subr.bf16.mxu0 0
    %328 = vmatpush1.bf16.msra.mxu0 %v306
    %329 = vmatprep.subr.bf16.mxu0 0
    %330 = vmatpush1.bf16.msra.mxu0 %v307
    %331 = vmatprep.subr.bf16.mxu0 0
    %332 = vmatpush1.bf16.msra.mxu0 %v308
    %333 = vmatprep.subr.bf16.mxu0 0
    %334 = vmatpush1.bf16.msra.mxu0 0
    %335 = vmatprep.subr.bf16.mxu0 0
    %336 = vmatpush1.bf16.msra.mxu0 0
    %337 = vmatprep.subr.bf16.mxu0 0
    %338 = vmatpush1.bf16.msra.mxu0 0
    %339 = vmatprep.subr.bf16.mxu0 0
    %340 = vmatpush1.bf16.msra.mxu0 0
    %341 = vmatprep.subr.bf16.mxu0 0
    %342 = vmatpush1.bf16.msra.mxu0 0
    %343 = vmatprep.subr.bf16.mxu0 0
    %344 = vmatpush1.bf16.msra.mxu0 0
    %345 = vmatprep.subr.bf16.mxu0 0
    %346 = vmatpush1.bf16.msra.mxu0 0
    %347 = vmatprep.subr.bf16.mxu0 0
    %348 = vmatpush1.bf16.msra.mxu0 0
    %349 = vmatprep.mubr.bf16.mxu0 0
    %350 = vmatmul.mubr.bf16.gmra.mrb[0].mxu0 %v245
    %v351 = vpop.f32.mrb[0].mxu0
    %v352 = vadd.f32 %v267, %v351
    %v353 = vpop.f32.mrb[0].mxu0
    %v354 = vpop.f32.mrb[0].mxu0
    %v355 = vadd.f32 %v267, %v354
    %v356 = vpop.f32.mrb[0].mxu0
    %357 = vdwg.mxu0
    %v358 = vadd.f32 %v352, %v115
    %v359 = vadd.f32 %v355, %v116
    %360 = vst.msk [vmem:[#allocation14] sm:$0xff] %vm117, %v358
    %361 = vst.msk [vmem:[#allocation14 + $0x8] sm:$0xff] %vm117, %v359
    // Predicated region
    $region58: #{tpu_custom_call.1} parent=1 // pred_check
      _
    $region59: #{tpu_custom_call.1} parent=1 // pred_check_branch
      %363 = sbr.rel (0) target = $region61
    $region60: #{tpu_custom_call.1} parent=1 // pred_region
      %s365 = ssub.s32 256, 256
      %366 = vsyncadd [#allocation4], %s365
      %s367 = sshll.u32 [#allocation14], 4
      %s368 = int_to_ptr.vmem [resolvable:$true] %s367
      %373 = dma.vmem_to_hbm [thread:$0]  %s368, 256, %s7, [#allocation4], 128, 128, 8
    $region61: #{tpu_custom_call.1} parent=1 // pred_fallthru
      _
    // Predicated region
    $region62: #{tpu_custom_call.1} parent=1 // pred_check
      _
    $region63: #{tpu_custom_call.1} parent=1 // pred_check_branch
      %375 = sbr.rel (0) target = $region65
    $region64: #{tpu_custom_call.1} parent=1 // pred_region
      %376 = dma.done [#allocation4], 256
    $region65: #{tpu_custom_call.1} parent=1 // pred_fallthru
      _
    %377 = vsyncpa [#allocation3], 1
    %378 = vsyncpa [#allocation6], 1
    %379 = vsyncpa [#allocation9], 1
    %380 = vsyncpa [#allocation12], 1
    %381 = vsyncpa [#allocation4], 1

// kernel: tpu_custom_call.1
$region0: #{tpu_custom_call.1}
  #allocation0 [shape = 'u32[]', space=smem, size = 0x4, offset = 0x4, fixed_abs, tag = 'smem constant byte address 0x4 - core index']
  #allocation1 [shape = 'u32[144,128]{1,0:T(1,128)}', space=vmem, size = 0x12000, scoped, tag = 'internal scratch']
  %s0 = inlined_call_operand.hbm [shape: f32[16,32], index: 0, kind: input, shape index: {}]
  %s1 = inlined_call_operand.hbm [shape: f32[1,32], index: 1, kind: input, shape index: {}]
  %s2 = inlined_call_operand.hbm [shape: f32[1,32], index: 2, kind: input, shape index: {}]
  %s3 = inlined_call_operand.hbm [shape: bf16[32,128], index: 3, kind: input, shape index: {}]
  %s4 = inlined_call_operand.hbm [shape: f32[1,128], index: 4, kind: input, shape index: {}]
  %s5 = inlined_call_operand.hbm [shape: bf16[128,32], index: 5, kind: input, shape index: {}]
  %s6 = inlined_call_operand.hbm [shape: f32[1,32], index: 6, kind: input, shape index: {}]
  %s7 = inlined_call_operand.hbm [shape: f32[16,32], index: 7, kind: output, shape index: {}]
  %s8 = sld [smem:[#allocation0]]
  $region66: #{tpu_custom_call.1} parent=0
    _
  %s10 = ssub.s32 1, %s8
  %s11 = scalar_select 0, %s10, %s8
  $region1: #{tpu_custom_call.1} parent=0
    #allocation2 [shape = 'u8[8192]{0}', space=vmem, size = 0x2000, scoped, tag = 'input window, operand 0, single buffered']
    #allocation3 [shape = 's32[1]{0}', space=sflag, size = 0x4, scoped, tag = 'scoped memory for tpu_custom_call.1']
    #allocation4 [shape = 's32[1]{0}', space=sflag, size = 0x4, scoped, tag = 'scoped memory for tpu_custom_call.1']
    #allocation5 [shape = 'u8[512]{0}', space=vmem, size = 0x400, scoped, tag = 'input window, operand 1, single buffered']
    #allocation6 [shape = 's32[1]{0}', space=sflag, size = 0x4, scoped, tag = 'scoped memory for tpu_custom_call.1']
    #allocation7 [shape = 'u8[512]{0}', space=vmem, size = 0x400, scoped, tag = 'input window, operand 2, single buffered']
    #allocation8 [shape = 'u8[8192]{0}', space=vmem, size = 0x2000, scoped, tag = 'input window, operand 3, single buffered']
    #allocation9 [shape = 's32[1]{0}', space=sflag, size = 0x4, scoped, tag = 'scoped memory for tpu_custom_call.1']
    #allocation10 [shape = 'u8[512]{0}', space=vmem, size = 0x400, scoped, tag = 'input window, operand 4, single buffered']
    #allocation11 [shape = 'u8[32768]{0}', space=vmem, size = 0x8000, scoped, tag = 'input window, operand 5, single buffered']
    #allocation12 [shape = 's32[1]{0}', space=sflag, size = 0x4, scoped, tag = 'scoped memory for tpu_custom_call.1']
    #allocation13 [shape = 'u8[512]{0}', space=vmem, size = 0x400, scoped, tag = 'input window, operand 6, single buffered']
    #allocation14 [shape = 'u8[8192]{0}', space=vmem, size = 0x2000, scoped, tag = 'output window, operand 0, single buffered']
    %12 = vsyncpa [#allocation3], 0
    %13 = vsyncpa [#allocation6], 0
    %14 = vsyncpa [#allocation9], 0
    %15 = vsyncpa [#allocation12], 0
    %16 = vsyncpa [#allocation4], 0
    // Predicated region
    $region2: #{tpu_custom_call.1} parent=1 // pred_check
      _
    $region3: #{tpu_custom_call.1} parent=1 // pred_check_branch
      %18 = sbr.rel (0) target = $region5
    $region4: #{tpu_custom_call.1} parent=1 // pred_region
      %s20 = ssub.s32 256, 256
      %21 = vsyncadd [#allocation3], %s20
      %s22 = sshll.u32 [#allocation2], 4
      %s23 = int_to_ptr.vmem [resolvable:$true] %s22
      %28 = dma.hbm_to_vmem [thread:$0]  %s0, 256, %s23, [#allocation3], 128, 128, 8
    $region5: #{tpu_custom_call.1} parent=1 // pred_fallthru
      _
    // Predicated region
    $region6: #{tpu_custom_call.1} parent=1 // pred_check
      _
    $region7: #{tpu_custom_call.1} parent=1 // pred_check_branch
      %30 = sbr.rel (0) target = $region9
    $region8: #{tpu_custom_call.1} parent=1 // pred_region
      %s32 = ssub.s32 16, 16
      %33 = vsyncadd [#allocation6], %s32
      %s35 = sshll.u32 [#allocation5], 4
      %s36 = int_to_ptr.vmem [resolvable:$true] %s35
      %38 = dma.hbm_to_vmem [thread:$0]  %s1, 16, %s36, [#allocation6]
    $region9: #{tpu_custom_call.1} parent=1 // pred_fallthru
      _
    // Predicated region
    $region10: #{tpu_custom_call.1} parent=1 // pred_check
      _
    $region11: #{tpu_custom_call.1} parent=1 // pred_check_branch
      %40 = sbr.rel (0) target = $region13
    $region12: #{tpu_custom_call.1} parent=1 // pred_region
      %s42 = ssub.s32 16, 16
      %43 = vsyncadd [#allocation6], %s42
      %s45 = sshll.u32 [#allocation7], 4
      %s46 = int_to_ptr.vmem [resolvable:$true] %s45
      %48 = dma.hbm_to_vmem [thread:$0]  %s2, 16, %s46, [#allocation6]
    $region13: #{tpu_custom_call.1} parent=1 // pred_fallthru
      _
    // Predicated region
    $region14: #{tpu_custom_call.1} parent=1 // pred_check
      _
    $region15: #{tpu_custom_call.1} parent=1 // pred_check_branch
      %50 = sbr.rel (0) target = $region17
    $region16: #{tpu_custom_call.1} parent=1 // pred_region
      %s52 = ssub.s32 256, 256
      %53 = vsyncadd [#allocation9], %s52
      %s54 = sshll.u32 [#allocation8], 4
      %s55 = int_to_ptr.vmem [resolvable:$true] %s54
      %60 = dma.hbm_to_vmem [thread:$0]  %s3, 256, %s55, [#allocation9], 64, 64, 4
    $region17: #{tpu_custom_call.1} parent=1 // pred_fallthru
      _
    // Predicated region
    $region18: #{tpu_custom_call.1} parent=1 // pred_check
      _
    $region19: #{tpu_custom_call.1} parent=1 // pred_check_branch
      %62 = sbr.rel (0) target = $region21
    $region20: #{tpu_custom_call.1} parent=1 // pred_region
      %s64 = ssub.s32 16, 16
      %65 = vsyncadd [#allocation9], %s64
      %s67 = sshll.u32 [#allocation10], 4
      %s68 = int_to_ptr.vmem [resolvable:$true] %s67
      %70 = dma.hbm_to_vmem [thread:$0]  %s4, 16, %s68, [#allocation9]
    $region21: #{tpu_custom_call.1} parent=1 // pred_fallthru
      _
    // Predicated region
    $region22: #{tpu_custom_call.1} parent=1 // pred_check
      _
    $region23: #{tpu_custom_call.1} parent=1 // pred_check_branch
      %72 = sbr.rel (0) target = $region25
    $region24: #{tpu_custom_call.1} parent=1 // pred_region
      %s74 = ssub.s32 1024, 1024
      %75 = vsyncadd [#allocation12], %s74
      %s76 = sshll.u32 [#allocation11], 4
      %s77 = int_to_ptr.vmem [resolvable:$true] %s76
      %82 = dma.hbm_to_vmem [thread:$0]  %s5, 1024, %s77, [#allocation12], 64, 64, 4
    $region25: #{tpu_custom_call.1} parent=1 // pred_fallthru
      _
    // Predicated region
    $region26: #{tpu_custom_call.1} parent=1 // pred_check
      _
    $region27: #{tpu_custom_call.1} parent=1 // pred_check_branch
      %84 = sbr.rel (0) target = $region29
    $region28: #{tpu_custom_call.1} parent=1 // pred_region
      %s86 = ssub.s32 16, 16
      %87 = vsyncadd [#allocation12], %s86
      %s89 = sshll.u32 [#allocation13], 4
      %s90 = int_to_ptr.vmem [resolvable:$true] %s89
      %92 = dma.hbm_to_vmem [thread:$0]  %s6, 16, %s90, [#allocation12]
    $region29: #{tpu_custom_call.1} parent=1 // pred_fallthru
      _
    // Predicated region
    $region30: #{tpu_custom_call.1} parent=1 // pred_check
      _
    $region31: #{tpu_custom_call.1} parent=1 // pred_check_branch
      %94 = sbr.rel (0) target = $region33
    $region32: #{tpu_custom_call.1} parent=1 // pred_region
      %95 = dma.done [#allocation3], 256
    $region33: #{tpu_custom_call.1} parent=1 // pred_fallthru
      _
    // Predicated region
    $region34: #{tpu_custom_call.1} parent=1 // pred_check
      _
    $region35: #{tpu_custom_call.1} parent=1 // pred_check_branch
      %97 = sbr.rel (0) target = $region37
    $region36: #{tpu_custom_call.1} parent=1 // pred_region
      %98 = dma.done [#allocation6], 16
    $region37: #{tpu_custom_call.1} parent=1 // pred_fallthru
      _
    // Predicated region
    $region38: #{tpu_custom_call.1} parent=1 // pred_check
      _
    $region39: #{tpu_custom_call.1} parent=1 // pred_check_branch
      %100 = sbr.rel (0) target = $region41
    $region40: #{tpu_custom_call.1} parent=1 // pred_region
      %101 = dma.done [#allocation6], 16
    $region41: #{tpu_custom_call.1} parent=1 // pred_fallthru
      _
    // Predicated region
    $region42: #{tpu_custom_call.1} parent=1 // pred_check
      _
    $region43: #{tpu_custom_call.1} parent=1 // pred_check_branch
      %103 = sbr.rel (0) target = $region45
    $region44: #{tpu_custom_call.1} parent=1 // pred_region
      %104 = dma.done [#allocation9], 256
    $region45: #{tpu_custom_call.1} parent=1 // pred_fallthru
      _
    // Predicated region
    $region46: #{tpu_custom_call.1} parent=1 // pred_check
      _
    $region47: #{tpu_custom_call.1} parent=1 // pred_check_branch
      %106 = sbr.rel (0) target = $region49
    $region48: #{tpu_custom_call.1} parent=1 // pred_region
      %107 = dma.done [#allocation9], 16
    $region49: #{tpu_custom_call.1} parent=1 // pred_fallthru
      _
    // Predicated region
    $region50: #{tpu_custom_call.1} parent=1 // pred_check
      _
    $region51: #{tpu_custom_call.1} parent=1 // pred_check_branch
      %109 = sbr.rel (0) target = $region53
    $region52: #{tpu_custom_call.1} parent=1 // pred_region
      %110 = dma.done [#allocation12], 1024
    $region53: #{tpu_custom_call.1} parent=1 // pred_fallthru
      _
    // Predicated region
    $region54: #{tpu_custom_call.1} parent=1 // pred_check
      _
    $region55: #{tpu_custom_call.1} parent=1 // pred_check_branch
      %112 = sbr.rel (0) target = $region57
    $region56: #{tpu_custom_call.1} parent=1 // pred_region
      %113 = dma.done [#allocation12], 16
    $region57: #{tpu_custom_call.1} parent=1 // pred_fallthru
      _
    %v115 = vld [vmem:[#allocation2] sm:$0xff]
    %v116 = vld [vmem:[#allocation2 + $0x8] sm:$0xff]
    %vm117 = vcmask 261120
    %v118 = vsel %vm117, %v115, 0.0
    %119 = vadd.xlane.f32.xlu0 %v118
    %v120 = vpop.xlane.xlu0 %119
    %v121 = vsel %vm117, %v116, 0.0
    %122 = vadd.xlane.f32.xlu0 %v121
    %v123 = vpop.xlane.xlu0 %122
    %v124 = vrcp.pop 32.0
    %v125 = vmul.f32 %v120, %v124
    %v126 = vmul.f32 %v123, %v124
    %v127 = vsub.f32 %v115, %v125
    %v128 = vsub.f32 %v116, %v126
    %v129 = vmul.f32 %v127, %v127
    %v130 = vmul.f32 %v128, %v128
    %v131 = vsel %vm117, %v129, 0.0
    %132 = vadd.xlane.f32.xlu0 %v131
    %v133 = vpop.xlane.xlu0 %132
    %v134 = vsel %vm117, %v130, 0.0
    %135 = vadd.xlane.f32.xlu0 %v134
    %v136 = vpop.xlane.xlu0 %135
    %v137 = vmul.f32 %v133, %v124
    %v138 = vmul.f32 %v136, %v124
    %v139 = vadd.f32 %v137, 1e-05
    %v140 = vadd.f32 %v138, 1e-05
    %v141 = vrsqrt.pop %v139
    %v142 = vrsqrt.pop %v140
    %v143 = vmul.f32 %v127, %v141
    %v144 = vmul.f32 %v128, %v142
    %v145 = vld [vmem:[#allocation5] sm:$0x1]
    %v147 = vlaneseq
    %v148 = vshrl.u32 %v147, 7
    %v149 = vsub.s32 0, %v148
    %v150 = vrot.slane %v145, %v149
    %v152 = vmul.f32 %v143, %v150
    %v153 = vmul.f32 %v144, %v150
    %v154 = vld [vmem:[#allocation7] sm:$0x1]
    %v156 = vlaneseq
    %v157 = vshrl.u32 %v156, 7
    %v158 = vsub.s32 0, %v157
    %v159 = vrot.slane %v154, %v158
    %v161 = vadd.f32 %v152, %v159
    %v162 = vadd.f32 %v153, %v159
    %v163 = vpack.c.bf16 %v162, %v161
    %v164 = vld [vmem:[#allocation8] sm:$0xf]
    %v165 = vld [vmem:[#allocation8 + $0x4] sm:$0xf]
    %v166 = vld [vmem:[#allocation8 + $0x8] sm:$0xf]
    %v167 = vld [vmem:[#allocation8 + $0xc] sm:$0xf]
    %v168 = vld [vmem:[#allocation10] sm:$0x1]
    %v170 = vlaneseq
    %v171 = vshrl.u32 %v170, 7
    %v172 = vsub.s32 0, %v171
    %v173 = vrot.slane %v168, %v172
    %v179 = vunpack.c.l.b16 %v164
    %v180 = vunpack.c.l.b16 %v165
    %v181 = vunpack.c.l.b16 %v166
    %v182 = vunpack.c.l.b16 %v167
    %v183 = vpack.c.b16 %v180, %v179
    %v184 = vpack.c.b16 %v182, %v181
    %v188 = vsel %vm117, %v163, 0
    %190 = vmatprep.subr.bf16.mxu0 0
    %191 = vmatpush1.bf16.msra.mxu0 %v183
    %192 = vmatprep.subr.bf16.mxu0 0
    %193 = vmatpush1.bf16.msra.mxu0 %v184
    %194 = vmatprep.subr.bf16.mxu0 0
    %195 = vmatpush1.bf16.msra.mxu0 0
    %196 = vmatprep.subr.bf16.mxu0 0
    %197 = vmatpush1.bf16.msra.mxu0 0
    %198 = vmatprep.subr.bf16.mxu0 0
    %199 = vmatpush1.bf16.msra.mxu0 0
    %200 = vmatprep.subr.bf16.mxu0 0
    %201 = vmatpush1.bf16.msra.mxu0 0
    %202 = vmatprep.subr.bf16.mxu0 0
    %203 = vmatpush1.bf16.msra.mxu0 0
    %204 = vmatprep.subr.bf16.mxu0 0
    %205 = vmatpush1.bf16.msra.mxu0 0
    %206 = vmatprep.subr.bf16.mxu0 0
    %207 = vmatpush1.bf16.msra.mxu0 0
    %208 = vmatprep.subr.bf16.mxu0 0
    %209 = vmatpush1.bf16.msra.mxu0 0
    %210 = vmatprep.subr.bf16.mxu0 0
    %211 = vmatpush1.bf16.msra.mxu0 0
    %212 = vmatprep.subr.bf16.mxu0 0
    %213 = vmatpush1.bf16.msra.mxu0 0
    %214 = vmatprep.subr.bf16.mxu0 0
    %215 = vmatpush1.bf16.msra.mxu0 0
    %216 = vmatprep.subr.bf16.mxu0 0
    %217 = vmatpush1.bf16.msra.mxu0 0
    %218 = vmatprep.subr.bf16.mxu0 0
    %219 = vmatpush1.bf16.msra.mxu0 0
    %220 = vmatprep.subr.bf16.mxu0 0
    %221 = vmatpush1.bf16.msra.mxu0 0
    %222 = vmatprep.mubr.bf16.mxu0 0
    %223 = vmatmul.mubr.bf16.gmra.mrb[0].mxu0 %v188
    %v224 = vpop.f32.mrb[0].mxu0
    %v225 = vadd.f32 %v173, %v224
    %v226 = vpop.f32.mrb[0].mxu0
    %v227 = vpop.f32.mrb[0].mxu0
    %v228 = vadd.f32 %v173, %v227
    %v229 = vpop.f32.mrb[0].mxu0
    %230 = vdwg.mxu0
    %v231 = vxor.u32 %v225, 2147483648
    %v232 = vxor.u32 %v228, 2147483648
    %v233 = vmul.f32 %v231, 1.442695
    %v234 = vpow.pop %v233
    %v235 = vmul.f32 %v232, 1.442695
    %v236 = vpow.pop %v235
    %v237 = vadd.f32 %v234, 1.0
    %v238 = vadd.f32 %v236, 1.0
    %v239 = vrcp.pop %v237
    %v240 = vmul.f32 1.0, %v239
    %v241 = vrcp.pop %v238
    %v242 = vmul.f32 1.0, %v241
    %v243 = vmul.f32 %v225, %v240
    %v244 = vmul.f32 %v228, %v242
    %v245 = vpack.c.bf16 %v244, %v243
    %v246 = vld [vmem:[#allocation11] sm:$0xf]
    %v247 = vld [vmem:[#allocation11 + $0x4] sm:$0xf]
    %v248 = vld [vmem:[#allocation11 + $0x8] sm:$0xf]
    %v249 = vld [vmem:[#allocation11 + $0xc] sm:$0xf]
    %v250 = vld [vmem:[#allocation11 + $0x10] sm:$0xf]
    %v251 = vld [vmem:[#allocation11 + $0x14] sm:$0xf]
    %v252 = vld [vmem:[#allocation11 + $0x18] sm:$0xf]
    %v253 = vld [vmem:[#allocation11 + $0x1c] sm:$0xf]
    %v254 = vld [vmem:[#allocation11 + $0x20] sm:$0xf]
    %v255 = vld [vmem:[#allocation11 + $0x24] sm:$0xf]
    %v256 = vld [vmem:[#allocation11 + $0x28] sm:$0xf]
    %v257 = vld [vmem:[#allocation11 + $0x2c] sm:$0xf]
    %v258 = vld [vmem:[#allocation11 + $0x30] sm:$0xf]
    %v259 = vld [vmem:[#allocation11 + $0x34] sm:$0xf]
    %v260 = vld [vmem:[#allocation11 + $0x38] sm:$0xf]
    %v261 = vld [vmem:[#allocation11 + $0x3c] sm:$0xf]
    %v262 = vld [vmem:[#allocation13] sm:$0x1]
    %v264 = vlaneseq
    %v265 = vshrl.u32 %v264, 7
    %v266 = vsub.s32 0, %v265
    %v267 = vrot.slane %v262, %v266
    %v285 = vunpack.c.l.b16 %v246
    %v286 = vunpack.c.l.b16 %v247
    %v287 = vunpack.c.l.b16 %v248
    %v288 = vunpack.c.l.b16 %v249
    %v289 = vunpack.c.l.b16 %v250
    %v290 = vunpack.c.l.b16 %v251
    %v291 = vunpack.c.l.b16 %v252
    %v292 = vunpack.c.l.b16 %v253
    %v293 = vunpack.c.l.b16 %v254
    %v294 = vunpack.c.l.b16 %v255
    %v295 = vunpack.c.l.b16 %v256
    %v296 = vunpack.c.l.b16 %v257
    %v297 = vunpack.c.l.b16 %v258
    %v298 = vunpack.c.l.b16 %v259
    %v299 = vunpack.c.l.b16 %v260
    %v300 = vunpack.c.l.b16 %v261
    %v301 = vpack.c.b16 %v286, %v285
    %v302 = vpack.c.b16 %v288, %v287
    %v303 = vpack.c.b16 %v290, %v289
    %v304 = vpack.c.b16 %v292, %v291
    %v305 = vpack.c.b16 %v294, %v293
    %v306 = vpack.c.b16 %v296, %v295
    %v307 = vpack.c.b16 %v298, %v297
    %v308 = vpack.c.b16 %v300, %v299
    %317 = vmatprep.subr.bf16.mxu0 0
    %318 = vmatpush1.bf16.msra.mxu0 %v301
    %319 = vmatprep.subr.bf16.mxu0 0
    %320 = vmatpush1.bf16.msra.mxu0 %v302
    %321 = vmatprep.subr.bf16.mxu0 0
    %322 = vmatpush1.bf16.msra.mxu0 %v303
    %323 = vmatprep.subr.bf16.mxu0 0
    %324 = vmatpush1.bf16.msra.mxu0 %v304
    %325 = vmatprep.subr.bf16.mxu0 0
    %326 = vmatpush1.bf16.msra.mxu0 %v305
    %327 = vmatprep.subr.bf16.mxu0 0
    %328 = vmatpush1.bf16.msra.mxu0 %v306
    %329 = vmatprep.subr.bf16.mxu0 0
    %330 = vmatpush1.bf16.msra.mxu0 %v307
    %331 = vmatprep.subr.bf16.mxu0 0
    %332 = vmatpush1.bf16.msra.mxu0 %v308
    %333 = vmatprep.subr.bf16.mxu0 0
    %334 = vmatpush1.bf16.msra.mxu0 0
    %335 = vmatprep.subr.bf16.mxu0 0
    %336 = vmatpush1.bf16.msra.mxu0 0
    %337 = vmatprep.subr.bf16.mxu0 0
    %338 = vmatpush1.bf16.msra.mxu0 0
    %339 = vmatprep.subr.bf16.mxu0 0
    %340 = vmatpush1.bf16.msra.mxu0 0
    %341 = vmatprep.subr.bf16.mxu0 0
    %342 = vmatpush1.bf16.msra.mxu0 0
    %343 = vmatprep.subr.bf16.mxu0 0
    %344 = vmatpush1.bf16.msra.mxu0 0
    %345 = vmatprep.subr.bf16.mxu0 0
    %346 = vmatpush1.bf16.msra.mxu0 0
    %347 = vmatprep.subr.bf16.mxu0 0
    %348 = vmatpush1.bf16.msra.mxu0 0
    %349 = vmatprep.mubr.bf16.mxu0 0
    %350 = vmatmul.mubr.bf16.gmra.mrb[0].mxu0 %v245
    %v351 = vpop.f32.mrb[0].mxu0
    %v352 = vadd.f32 %v267, %v351
    %v353 = vpop.f32.mrb[0].mxu0
    %v354 = vpop.f32.mrb[0].mxu0
    %v355 = vadd.f32 %v267, %v354
    %v356 = vpop.f32.mrb[0].mxu0
    %357 = vdwg.mxu0
    %v358 = vadd.f32 %v352, %v115
    %v359 = vadd.f32 %v355, %v116
    %360 = vst.msk [vmem:[#allocation14] sm:$0xff] %vm117, %v358
    %361 = vst.msk [vmem:[#allocation14 + $0x8] sm:$0xff] %vm117, %v359
    // Predicated region
    $region58: #{tpu_custom_call.1} parent=1 // pred_check
      _
    $region59: #{tpu_custom_call.1} parent=1 // pred_check_branch
      %363 = sbr.rel (0) target = $region61
    $region60: #{tpu_custom_call.1} parent=1 // pred_region
      %s365 = ssub.s32 256, 256
      %366 = vsyncadd [#allocation4], %s365
      %s367 = sshll.u32 [#allocation14], 4
      %s368 = int_to_ptr.vmem [resolvable:$true] %s367
      %373 = dma.vmem_to_hbm [thread:$0]  %s368, 256, %s7, [#allocation4], 128, 128, 8
    $region61: #{tpu_custom_call.1} parent=1 // pred_fallthru
      _
    // Predicated region
    $region62: #{tpu_custom_call.1} parent=1 // pred_check
      _
    $region63: #{tpu_custom_call.1} parent=1 // pred_check_branch
      %375 = sbr.rel (0) target = $region65
    $region64: #{tpu_custom_call.1} parent=1 // pred_region
      %376 = dma.done [#allocation4], 256
    $region65: #{tpu_custom_call.1} parent=1 // pred_fallthru
      _
    %377 = vsyncpa [#allocation3], 1
    %378 = vsyncpa [#allocation6], 1
    %379 = vsyncpa [#allocation9], 1
    %380 = vsyncpa [#allocation12], 1
    %381 = vsyncpa [#allocation4], 1

</llo_original>
